<compile_context>
chip_gen: v7x
topology: tpu7x:2x2x1
jax: 0.10.0
libtpu: 0.0.40
codegen_flags: <defaults>
</compile_context>

<pallas_src>
import functools

import jax
import jax.numpy as jnp
from jax.experimental import pallas as pl
from jax.experimental.pallas import tpu as pltpu

LANE = 128  # lane-dense hidden width (top_mlp_units must be < LANE)


def _round_up(n, m):
    return ((n + m - 1) // m) * m


def mf_kernel(idx0_ref, idx1_ref, t0_hbm, t1_hbm, w2_ref, w3_ref, o_ref,
              g0, g1, sem, *, tb):
    """Fused MF forward for one batch tile of `tb` rows.

    idx0_ref / idx1_ref : SMEM [bp] int32 category indices (scalar prefetch).
    t0_hbm / t1_hbm     : HBM  [c0p,128] / [c1p,128] f32 folded layer-1 tables.
    w2_ref / w3_ref     : VMEM-resident bf16 [128,128] / [128,outp] packed weights.
    g0 / g1             : VMEM f32 [tb,128] gather buffers.
    """
    base = pl.program_id(0) * tb

    # ---- Phase 1: issue all row-gather DMAs (2 per batch element) -------------
    @pl.loop(0, tb)
    def _start(r):
        i0 = idx0_ref[base + r]
        i1 = idx1_ref[base + r]
        pltpu.make_async_copy(t0_hbm.at[pl.ds(i0, 1), :],
                              g0.at[pl.ds(r, 1), :], sem.at[0]).start()
        pltpu.make_async_copy(t1_hbm.at[pl.ds(i1, 1), :],
                              g1.at[pl.ds(r, 1), :], sem.at[1]).start()

    # ---- Phase 2: wait for all of them (dummy row-0 src; wait only needs the
    # destination shape + semaphore, mirroring the paged-attention pattern). ----
    @pl.loop(0, tb)
    def _wait(r):
        pltpu.make_async_copy(t0_hbm.at[pl.ds(0, 1), :],
                              g0.at[pl.ds(r, 1), :], sem.at[0]).wait()
        pltpu.make_async_copy(t1_hbm.at[pl.ds(0, 1), :],
                              g1.at[pl.ds(r, 1), :], sem.at[1]).wait()

    # ---- Layer 1: the gathered rows already hold emb @ W1 (+ b1); sum + ReLU. --
    h = jnp.maximum(g0[...] + g1[...], 0.0)          # [tb,128] f32, lane 127 == 1.0

    # ---- Layers 2/3: bf16 operands on the MXU, f32 accumulation. ---------------
    h = jnp.dot(h.astype(jnp.bfloat16), w2_ref[...],
                preferred_element_type=jnp.float32)
    h = jnp.maximum(h, 0.0)                          # lane 127 stays exactly 1.0
    o_ref[...] = jnp.dot(h.astype(jnp.bfloat16), w3_ref[...],
                         preferred_element_type=jnp.float32)


def pack_params(emb0, emb1, w1, b1, w2, b2, w3, b3):
    """Fold the embedding tables into layer 1 and pack the MLP weights.

    Returns (t0, t1, w2p, w3p):
      t0  [c0p,128]  f32  : emb0 @ W1[:emb_dim] + b1, lane 127 = 1.0 (bias carrier;
                            padded rows beyond cnt0 also carry it - harmless).
      t1  [c1p,128]  f32  : emb1 @ W1[emb_dim:]       (lane 127 stays 0).
      w2p [128,128]  bf16 : W2 with row 127 = b2 and [127,127] = 1.0.
      w3p [128,outp] bf16 : W3 with row 127 = b3.
    """
    emb_dim = emb0.shape[1]
    cnt0, cnt1 = emb0.shape[0], emb1.shape[0]
    u1, u2, nd = w1.shape[1], w2.shape[1], w3.shape[1]
    assert max(u1, u2) < LANE, "lane 127 must stay free as the bias carrier"
    outp = _round_up(nd, 8)

    c0p, c1p = _round_up(cnt0, 8), _round_up(cnt1, 8)

    t0 = jnp.zeros((c0p, LANE), jnp.float32)
    t0 = t0.at[:cnt0, :u1].set(emb0 @ w1[:emb_dim] + b1[None, :])
    t0 = t0.at[:, LANE - 1].set(1.0)                 # constant-1 bias carrier

    t1 = jnp.zeros((c1p, LANE), jnp.float32)
    t1 = t1.at[:cnt1, :u1].set(emb1 @ w1[emb_dim:])

    w2p = jnp.zeros((LANE, LANE), jnp.float32)
    w2p = w2p.at[:u1, :u2].set(w2)
    w2p = w2p.at[LANE - 1, :u2].set(b2)
    w2p = w2p.at[LANE - 1, LANE - 1].set(1.0)        # keep the 1.0 carrier alive

    w3p = jnp.zeros((LANE, outp), jnp.float32)
    w3p = w3p.at[:u2, :nd].set(w3)
    w3p = w3p.at[LANE - 1, :nd].set(b3)

    return t0, t1, w2p.astype(jnp.bfloat16), w3p.astype(jnp.bfloat16)


def mf_forward(x, emb0, emb1, w1, b1, w2, b2, w3, b3, *, batch_tile=512):
    B = x.shape[0]
    num_dense = w3.shape[1]
    outp = _round_up(num_dense, 8)

    t0, t1, w2p, w3p = pack_params(emb0, emb1, w1, b1, w2, b2, w3, b3)

    tb = min(_round_up(B, 8), batch_tile)            # batch tile (multiple of 8)
    bp = _round_up(B, tb)

    idx0 = x[:, 0].astype(jnp.int32)
    idx1 = x[:, 1].astype(jnp.int32)
    if bp != B:                                      # pad with index 0, sliced off later
        idx0 = jnp.pad(idx0, (0, bp - B))
        idx1 = jnp.pad(idx1, (0, bp - B))

    kernel = functools.partial(mf_kernel, tb=tb)

    def build(single_buffer_weights):
        if single_buffer_weights:
            # Constant index_map -> the block never changes; 1 buffer is enough.
            w2_spec = pl.BlockSpec((LANE, LANE), lambda i, *_: (0, 0),
                                   pipeline_mode=pl.Buffered(1))
            w3_spec = pl.BlockSpec((LANE, outp), lambda i, *_: (0, 0),
                                   pipeline_mode=pl.Buffered(1))
        else:
            w2_spec = pl.BlockSpec((LANE, LANE), lambda i, *_: (0, 0))
            w3_spec = pl.BlockSpec((LANE, outp), lambda i, *_: (0, 0))

        grid_spec = pltpu.PrefetchScalarGridSpec(
            num_scalar_prefetch=2,                   # idx0, idx1 -> SMEM
            grid=(bp // tb,),
            in_specs=[
                pl.BlockSpec(memory_space=pl.ANY),   # t0: stays in HBM, DMA-gathered
                pl.BlockSpec(memory_space=pl.ANY),   # t1: stays in HBM, DMA-gathered
                w2_spec,                             # resident bf16 weights
                w3_spec,
            ],
            out_specs=pl.BlockSpec((tb, outp), lambda i, *_: (i, 0)),
            scratch_shapes=[
                pltpu.VMEM((tb, LANE), jnp.float32), # g0 gather buffer
                pltpu.VMEM((tb, LANE), jnp.float32), # g1 gather buffer
                pltpu.SemaphoreType.DMA((2,)),
            ],
        )
        return pl.pallas_call(
            kernel,
            out_shape=jax.ShapeDtypeStruct((bp, outp), jnp.float32),
            grid_spec=grid_spec,
            compiler_params=pltpu.CompilerParams(
                dimension_semantics=("parallel",),   # shards batch tiles across TCs
                vmem_limit_bytes=32 * 1024 * 1024,
            ),
        )

    try:
        out = build(True)(idx0, idx1, t0, t1, w2p, w3p)
    except Exception:
        # Fallback for JAX versions without BlockSpec.pipeline_mode support.
        out = build(False)(idx0, idx1, t0, t1, w2p, w3p)

    return out[:B, :num_dense]


def xavier_uniform(key, fan_in, fan_out):
    bound = jnp.sqrt(6.0 / (fan_in + fan_out))
    # Stored as [in, out] (transpose of PyTorch's [out, in]; the init is symmetric).
    return jax.random.uniform(key, (fan_in, fan_out), jnp.float32, -bound, bound)


if __name__ == "__main__":
    # Module hyper-parameters (consistent with the reference __init__).
    cat_counts = [10, 20]
    emb_dim = 8
    num_dense = 4
    top_mlp_units = [32, 32]
    B = 8

    key = jax.random.PRNGKey(0)
    keys = jax.random.split(key, 8)

    # Embedding tables: uniform(-0.05, 0.05).
    emb0 = jax.random.uniform(keys[0], (cat_counts[0], emb_dim), jnp.float32, -0.05, 0.05)
    emb1 = jax.random.uniform(keys[1], (cat_counts[1], emb_dim), jnp.float32, -0.05, 0.05)

    # MLP weights: xavier uniform, biases zero.
    in0 = emb_dim * len(cat_counts)                  # 16
    w1 = xavier_uniform(keys[2], in0, top_mlp_units[0])
    b1 = jnp.zeros((top_mlp_units[0],), jnp.float32)
    w2 = xavier_uniform(keys[3], top_mlp_units[0], top_mlp_units[1])
    b2 = jnp.zeros((top_mlp_units[1],), jnp.float32)
    w3 = xavier_uniform(keys[4], top_mlp_units[1], num_dense)
    b3 = jnp.zeros((num_dense,), jnp.float32)

    # Input: [B, num_cat] int32 category indices.
    x0 = jax.random.randint(keys[5], (B, 1), 0, cat_counts[0], jnp.int32)
    x1 = jax.random.randint(keys[6], (B, 1), 0, cat_counts[1], jnp.int32)
    x = jnp.concatenate([x0, x1], axis=1)

    out = mf_forward(x, emb0, emb1, w1, b1, w2, b2, w3, b3)
    out = jax.block_until_ready(out)

    # Pure-JAX f32 reference for sanity.
    h_ref = jnp.concatenate([emb0[x[:, 0]], emb1[x[:, 1]]], axis=1)
    h_ref = jnp.maximum(h_ref @ w1 + b1, 0.0)
    h_ref = jnp.maximum(h_ref @ w2 + b2, 0.0)
    ref = h_ref @ w3 + b3

    assert out.shape == (B, num_dense)
    # W2/W3 are stored in bf16 (f32 accumulation), so tolerance is relaxed vs f32.
    assert jnp.allclose(out, ref, atol=1e-2, rtol=1e-2), "mismatch vs JAX reference"

    print("KERNEL_OK")
</pallas_src>

<mosaic_0001>
module attributes {stable_mosaic.version = 11 : i64} {
  func.func @mf_kernel(%arg0: i32, %arg1: memref<8xi32, #tpu.memory_space<smem>>, %arg2: memref<8xi32, #tpu.memory_space<smem>>, %arg3: memref<16x128xf32, #tpu.memory_space<any>>, %arg4: memref<24x128xf32, #tpu.memory_space<any>>, %arg5: memref<128x128xbf16, #tpu.memory_space<vmem>>, %arg6: memref<128x8xbf16, #tpu.memory_space<vmem>>, %arg7: memref<8x8xf32, #tpu.memory_space<vmem>>, %arg8: memref<8x128xf32, #tpu.memory_space<vmem>>, %arg9: memref<8x128xf32, #tpu.memory_space<vmem>>, %arg10: memref<2x!tpu.dma_semaphore, #tpu.memory_space<semaphore_mem>>) attributes {dimension_semantics = [#tpu.dimension_semantics<parallel>], iteration_bounds = array<i64: 1>, scalar_prefetch = 2 : i64, scratch_operands = 3 : i64, tpu.core_type = #tpu.core_type<tc>, window_params = [{}, {}, {pipeline_mode = #tpu.pipeline_mode<synchronous>, transform_indices = @transform_2, window_bounds = array<i64: 128, 128>}, {pipeline_mode = #tpu.pipeline_mode<synchronous>, transform_indices = @transform_3, window_bounds = array<i64: 128, 8>}, {transform_indices = @transform_4, window_bounds = array<i64: 8, 8>}]} {
    %c8_i32 = arith.constant 8 : i32
    %0 = arith.muli %arg0, %c8_i32 : i32
    %c0_i32 = arith.constant 0 : i32
    %c8_i32_0 = arith.constant 8 : i32
    %1 = arith.addi %c0_i32, %c8_i32_0 : i32
    %c1_i32 = arith.constant 1 : i32
    scf.for %arg11 = %c0_i32 to %1 step %c1_i32  : i32 {
      %c1_i32_18 = arith.constant 1 : i32
      %17 = arith.muli %arg11, %c1_i32_18 : i32
      %c0_i32_19 = arith.constant 0 : i32
      %18 = arith.addi %c0_i32_19, %17 : i32
      %19 = arith.addi %0, %18 : i32
      %20 = arith.index_cast %19 : i32 to index
      %21 = memref.load %arg1[%20] : memref<8xi32, #tpu.memory_space<smem>>
      %22 = arith.addi %0, %18 : i32
      %23 = arith.index_cast %22 : i32 to index
      %24 = memref.load %arg2[%23] : memref<8xi32, #tpu.memory_space<smem>>
      %c0_i32_20 = arith.constant 0 : i32
      %c0_i32_21 = arith.constant 0 : i32
      %25 = tpu.memref_slice %arg3[%21, %c0_i32_21] : memref<16x128xf32, #tpu.memory_space<any>> -> memref<1x128xf32, #tpu.memory_space<any>>
      %c0_i32_22 = arith.constant 0 : i32
      %26 = tpu.memref_slice %arg8[%18, %c0_i32_22] : memref<8x128xf32, #tpu.memory_space<vmem>> -> memref<1x128xf32, #tpu.memory_space<vmem>>
      %27 = tpu.memref_slice %arg10[%c0_i32_20] : memref<2x!tpu.dma_semaphore, #tpu.memory_space<semaphore_mem>> -> memref<1x!tpu.dma_semaphore, #tpu.memory_space<semaphore_mem>>
      %28 = tpu.memref_squeeze %27 : memref<1x!tpu.dma_semaphore, #tpu.memory_space<semaphore_mem>> -> memref<!tpu.dma_semaphore, #tpu.memory_space<semaphore_mem>>
      tpu.enqueue_dma source(%25 : memref<1x128xf32, #tpu.memory_space<any>>) target(%26 : memref<1x128xf32, #tpu.memory_space<vmem>>) target_semaphore(%28 : memref<!tpu.dma_semaphore, #tpu.memory_space<semaphore_mem>>)
      %c1_i32_23 = arith.constant 1 : i32
      %c0_i32_24 = arith.constant 0 : i32
      %29 = tpu.memref_slice %arg4[%24, %c0_i32_24] : memref<24x128xf32, #tpu.memory_space<any>> -> memref<1x128xf32, #tpu.memory_space<any>>
      %c0_i32_25 = arith.constant 0 : i32
      %30 = tpu.memref_slice %arg9[%18, %c0_i32_25] : memref<8x128xf32, #tpu.memory_space<vmem>> -> memref<1x128xf32, #tpu.memory_space<vmem>>
      %31 = tpu.memref_slice %arg10[%c1_i32_23] : memref<2x!tpu.dma_semaphore, #tpu.memory_space<semaphore_mem>> -> memref<1x!tpu.dma_semaphore, #tpu.memory_space<semaphore_mem>>
      %32 = tpu.memref_squeeze %31 : memref<1x!tpu.dma_semaphore, #tpu.memory_space<semaphore_mem>> -> memref<!tpu.dma_semaphore, #tpu.memory_space<semaphore_mem>>
      tpu.enqueue_dma source(%29 : memref<1x128xf32, #tpu.memory_space<any>>) target(%30 : memref<1x128xf32, #tpu.memory_space<vmem>>) target_semaphore(%32 : memref<!tpu.dma_semaphore, #tpu.memory_space<semaphore_mem>>)
    }
    %c8_i32_1 = arith.constant 8 : i32
    %c0_i32_2 = arith.constant 0 : i32
    %c8_i32_3 = arith.constant 8 : i32
    %2 = arith.addi %c0_i32_2, %c8_i32_3 : i32
    %c1_i32_4 = arith.constant 1 : i32
    scf.for %arg11 = %c0_i32_2 to %2 step %c1_i32_4  : i32 {
      %c1_i32_18 = arith.constant 1 : i32
      %17 = arith.muli %arg11, %c1_i32_18 : i32
      %c0_i32_19 = arith.constant 0 : i32
      %18 = arith.addi %c0_i32_19, %17 : i32
      %c0_i32_20 = arith.constant 0 : i32
      %c0_i32_21 = arith.constant 0 : i32
      %c0_i32_22 = arith.constant 0 : i32
      %19 = tpu.memref_slice %arg3[%c0_i32_21, %c0_i32_22] : memref<16x128xf32, #tpu.memory_space<any>> -> memref<1x128xf32, #tpu.memory_space<any>>
      %c0_i32_23 = arith.constant 0 : i32
      %20 = tpu.memref_slice %arg8[%18, %c0_i32_23] : memref<8x128xf32, #tpu.memory_space<vmem>> -> memref<1x128xf32, #tpu.memory_space<vmem>>
      %21 = tpu.memref_slice %arg10[%c0_i32_20] : memref<2x!tpu.dma_semaphore, #tpu.memory_space<semaphore_mem>> -> memref<1x!tpu.dma_semaphore, #tpu.memory_space<semaphore_mem>>
      %22 = tpu.memref_squeeze %21 : memref<1x!tpu.dma_semaphore, #tpu.memory_space<semaphore_mem>> -> memref<!tpu.dma_semaphore, #tpu.memory_space<semaphore_mem>>
      tpu.wait_dma2 semaphore(%22 : memref<!tpu.dma_semaphore, #tpu.memory_space<semaphore_mem>>) src(%19 : memref<1x128xf32, #tpu.memory_space<any>>) dst(%20 : memref<1x128xf32, #tpu.memory_space<vmem>>)
      %c1_i32_24 = arith.constant 1 : i32
      %c0_i32_25 = arith.constant 0 : i32
      %c0_i32_26 = arith.constant 0 : i32
      %23 = tpu.memref_slice %arg4[%c0_i32_25, %c0_i32_26] : memref<24x128xf32, #tpu.memory_space<any>> -> memref<1x128xf32, #tpu.memory_space<any>>
      %c0_i32_27 = arith.constant 0 : i32
      %24 = tpu.memref_slice %arg9[%18, %c0_i32_27] : memref<8x128xf32, #tpu.memory_space<vmem>> -> memref<1x128xf32, #tpu.memory_space<vmem>>
      %25 = tpu.memref_slice %arg10[%c1_i32_24] : memref<2x!tpu.dma_semaphore, #tpu.memory_space<semaphore_mem>> -> memref<1x!tpu.dma_semaphore, #tpu.memory_space<semaphore_mem>>
      %26 = tpu.memref_squeeze %25 : memref<1x!tpu.dma_semaphore, #tpu.memory_space<semaphore_mem>> -> memref<!tpu.dma_semaphore, #tpu.memory_space<semaphore_mem>>
      tpu.wait_dma2 semaphore(%26 : memref<!tpu.dma_semaphore, #tpu.memory_space<semaphore_mem>>) src(%23 : memref<1x128xf32, #tpu.memory_space<any>>) dst(%24 : memref<1x128xf32, #tpu.memory_space<vmem>>)
    }
    %c8_i32_5 = arith.constant 8 : i32
    %c0 = arith.constant 0 : index
    %c0_6 = arith.constant 0 : index
    %3 = vector.load %arg8[%c0, %c0_6] : memref<8x128xf32, #tpu.memory_space<vmem>>, vector<8x128xf32>
    %c0_7 = arith.constant 0 : index
    %c0_8 = arith.constant 0 : index
    %4 = vector.load %arg9[%c0_7, %c0_8] : memref<8x128xf32, #tpu.memory_space<vmem>>, vector<8x128xf32>
    %5 = arith.addf %3, %4 : vector<8x128xf32>
    %cst = arith.constant 0.000000e+00 : f32
    %6 = vector.broadcast %cst : f32 to vector<8x128xf32>
    %7 = arith.maximumf %5, %6 : vector<8x128xf32>
    %8 = arith.truncf %7 : vector<8x128xf32> to vector<8x128xbf16>
    %c0_9 = arith.constant 0 : index
    %c0_10 = arith.constant 0 : index
    %9 = vector.load %arg5[%c0_9, %c0_10] : memref<128x128xbf16, #tpu.memory_space<vmem>>, vector<128x128xbf16>
    %cst_11 = arith.constant dense<0.000000e+00> : vector<8x128xf32>
    %10 = tpu.matmul %8, %9, %cst_11 {dimension_numbers = #tpu.dot_dimension_numbers<[1], [0], [0], [1], [0, 0, 1, 1], [], []>} : vector<8x128xbf16>, vector<128x128xbf16>, vector<8x128xf32> -> vector<8x128xf32>
    %cst_12 = arith.constant 0.000000e+00 : f32
    %11 = vector.broadcast %cst_12 : f32 to vector<8x128xf32>
    %12 = arith.maximumf %10, %11 : vector<8x128xf32>
    %13 = arith.truncf %12 : vector<8x128xf32> to vector<8x128xbf16>
    %c0_13 = arith.constant 0 : index
    %c0_14 = arith.constant 0 : index
    %14 = vector.load %arg6[%c0_13, %c0_14] : memref<128x8xbf16, #tpu.memory_space<vmem>>, vector<128x8xbf16>
    %cst_15 = arith.constant dense<0.000000e+00> : vector<8x8xf32>
    %15 = tpu.matmul %13, %14, %cst_15 {dimension_numbers = #tpu.dot_dimension_numbers<[1], [0], [0], [1], [0, 0, 1, 1], [], []>} : vector<8x128xbf16>, vector<128x8xbf16>, vector<8x8xf32> -> vector<8x8xf32>
    %c0_16 = arith.constant 0 : index
    %c0_17 = arith.constant 0 : index
    %16 = vector.load %arg7[%c0_16, %c0_17] : memref<8x8xf32, #tpu.memory_space<vmem>>, vector<8x8xf32>
    tpu.vector_store %arg7[%c0_16, %c0_17], %15 {strides = array<i32>} : memref<8x8xf32, #tpu.memory_space<vmem>>, vector<8x8xf32>,
    return
  }
  func.func @transform_2(%arg0: i32, %arg1: memref<8xi32, #tpu.memory_space<smem>>, %arg2: memref<8xi32, #tpu.memory_space<smem>>) -> (i32, i32) {
    %c0_i32 = arith.constant 0 : i32
    %c0_i32_0 = arith.constant 0 : i32
    %c0_i32_1 = arith.constant 0 : i32
    return %c0_i32, %c0_i32_0 : i32, i32
  }
  func.func @transform_3(%arg0: i32, %arg1: memref<8xi32, #tpu.memory_space<smem>>, %arg2: memref<8xi32, #tpu.memory_space<smem>>) -> (i32, i32) {
    %c0_i32 = arith.constant 0 : i32
    %c0_i32_0 = arith.constant 0 : i32
    %c0_i32_1 = arith.constant 0 : i32
    return %c0_i32, %c0_i32_0 : i32, i32
  }
  func.func @transform_4(%arg0: i32, %arg1: memref<8xi32, #tpu.memory_space<smem>>, %arg2: memref<8xi32, #tpu.memory_space<smem>>) -> (i32, i32) {
    %c0_i32 = arith.constant 0 : i32
    %c0_i32_0 = arith.constant 0 : i32
    return %arg0, %c0_i32 : i32, i32
  }
}

module attributes {stable_mosaic.version = 11 : i64} {
  func.func @mf_kernel(%arg0: i32, %arg1: memref<8xi32, #tpu.memory_space<smem>>, %arg2: memref<8xi32, #tpu.memory_space<smem>>, %arg3: memref<16x128xf32, #tpu.memory_space<any>>, %arg4: memref<24x128xf32, #tpu.memory_space<any>>, %arg5: memref<128x128xbf16, #tpu.memory_space<vmem>>, %arg6: memref<128x8xbf16, #tpu.memory_space<vmem>>, %arg7: memref<8x8xf32, #tpu.memory_space<vmem>>, %arg8: memref<8x128xf32, #tpu.memory_space<vmem>>, %arg9: memref<8x128xf32, #tpu.memory_space<vmem>>, %arg10: memref<2x!tpu.dma_semaphore, #tpu.memory_space<semaphore_mem>>) attributes {dimension_semantics = [#tpu.dimension_semantics<parallel>], iteration_bounds = array<i64: 1>, scalar_prefetch = 2 : i64, scratch_operands = 3 : i64, tpu.core_type = #tpu.core_type<tc>, window_params = [{}, {}, {pipeline_mode = #tpu.pipeline_mode<synchronous>, transform_indices = @transform_2, window_bounds = array<i64: 128, 128>}, {pipeline_mode = #tpu.pipeline_mode<synchronous>, transform_indices = @transform_3, window_bounds = array<i64: 128, 8>}, {transform_indices = @transform_4, window_bounds = array<i64: 8, 8>}]} {
    %c8_i32 = arith.constant 8 : i32
    %0 = arith.muli %arg0, %c8_i32 : i32
    %c0_i32 = arith.constant 0 : i32
    %c8_i32_0 = arith.constant 8 : i32
    %1 = arith.addi %c0_i32, %c8_i32_0 : i32
    %c1_i32 = arith.constant 1 : i32
    scf.for %arg11 = %c0_i32 to %1 step %c1_i32  : i32 {
      %c1_i32_18 = arith.constant 1 : i32
      %17 = arith.muli %arg11, %c1_i32_18 : i32
      %c0_i32_19 = arith.constant 0 : i32
      %18 = arith.addi %c0_i32_19, %17 : i32
      %19 = arith.addi %0, %18 : i32
      %20 = arith.index_cast %19 : i32 to index
      %21 = memref.load %arg1[%20] : memref<8xi32, #tpu.memory_space<smem>>
      %22 = arith.addi %0, %18 : i32
      %23 = arith.index_cast %22 : i32 to index
      %24 = memref.load %arg2[%23] : memref<8xi32, #tpu.memory_space<smem>>
      %c0_i32_20 = arith.constant 0 : i32
      %c0_i32_21 = arith.constant 0 : i32
      %25 = tpu.memref_slice %arg3[%21, %c0_i32_21] : memref<16x128xf32, #tpu.memory_space<any>> -> memref<1x128xf32, #tpu.memory_space<any>>
      %c0_i32_22 = arith.constant 0 : i32
      %26 = tpu.memref_slice %arg8[%18, %c0_i32_22] : memref<8x128xf32, #tpu.memory_space<vmem>> -> memref<1x128xf32, #tpu.memory_space<vmem>>
      %27 = tpu.memref_slice %arg10[%c0_i32_20] : memref<2x!tpu.dma_semaphore, #tpu.memory_space<semaphore_mem>> -> memref<1x!tpu.dma_semaphore, #tpu.memory_space<semaphore_mem>>
      %28 = tpu.memref_squeeze %27 : memref<1x!tpu.dma_semaphore, #tpu.memory_space<semaphore_mem>> -> memref<!tpu.dma_semaphore, #tpu.memory_space<semaphore_mem>>
      tpu.enqueue_dma source(%25 : memref<1x128xf32, #tpu.memory_space<any>>) target(%26 : memref<1x128xf32, #tpu.memory_space<vmem>>) target_semaphore(%28 : memref<!tpu.dma_semaphore, #tpu.memory_space<semaphore_mem>>)
      %c1_i32_23 = arith.constant 1 : i32
      %c0_i32_24 = arith.constant 0 : i32
      %29 = tpu.memref_slice %arg4[%24, %c0_i32_24] : memref<24x128xf32, #tpu.memory_space<any>> -> memref<1x128xf32, #tpu.memory_space<any>>
      %c0_i32_25 = arith.constant 0 : i32
      %30 = tpu.memref_slice %arg9[%18, %c0_i32_25] : memref<8x128xf32, #tpu.memory_space<vmem>> -> memref<1x128xf32, #tpu.memory_space<vmem>>
      %31 = tpu.memref_slice %arg10[%c1_i32_23] : memref<2x!tpu.dma_semaphore, #tpu.memory_space<semaphore_mem>> -> memref<1x!tpu.dma_semaphore, #tpu.memory_space<semaphore_mem>>
      %32 = tpu.memref_squeeze %31 : memref<1x!tpu.dma_semaphore, #tpu.memory_space<semaphore_mem>> -> memref<!tpu.dma_semaphore, #tpu.memory_space<semaphore_mem>>
      tpu.enqueue_dma source(%29 : memref<1x128xf32, #tpu.memory_space<any>>) target(%30 : memref<1x128xf32, #tpu.memory_space<vmem>>) target_semaphore(%32 : memref<!tpu.dma_semaphore, #tpu.memory_space<semaphore_mem>>)
    }
    %c8_i32_1 = arith.constant 8 : i32
    %c0_i32_2 = arith.constant 0 : i32
    %c8_i32_3 = arith.constant 8 : i32
    %2 = arith.addi %c0_i32_2, %c8_i32_3 : i32
    %c1_i32_4 = arith.constant 1 : i32
    scf.for %arg11 = %c0_i32_2 to %2 step %c1_i32_4  : i32 {
      %c1_i32_18 = arith.constant 1 : i32
      %17 = arith.muli %arg11, %c1_i32_18 : i32
      %c0_i32_19 = arith.constant 0 : i32
      %18 = arith.addi %c0_i32_19, %17 : i32
      %c0_i32_20 = arith.constant 0 : i32
      %c0_i32_21 = arith.constant 0 : i32
      %c0_i32_22 = arith.constant 0 : i32
      %19 = tpu.memref_slice %arg3[%c0_i32_21, %c0_i32_22] : memref<16x128xf32, #tpu.memory_space<any>> -> memref<1x128xf32, #tpu.memory_space<any>>
      %c0_i32_23 = arith.constant 0 : i32
      %20 = tpu.memref_slice %arg8[%18, %c0_i32_23] : memref<8x128xf32, #tpu.memory_space<vmem>> -> memref<1x128xf32, #tpu.memory_space<vmem>>
      %21 = tpu.memref_slice %arg10[%c0_i32_20] : memref<2x!tpu.dma_semaphore, #tpu.memory_space<semaphore_mem>> -> memref<1x!tpu.dma_semaphore, #tpu.memory_space<semaphore_mem>>
      %22 = tpu.memref_squeeze %21 : memref<1x!tpu.dma_semaphore, #tpu.memory_space<semaphore_mem>> -> memref<!tpu.dma_semaphore, #tpu.memory_space<semaphore_mem>>
      tpu.wait_dma2 semaphore(%22 : memref<!tpu.dma_semaphore, #tpu.memory_space<semaphore_mem>>) src(%19 : memref<1x128xf32, #tpu.memory_space<any>>) dst(%20 : memref<1x128xf32, #tpu.memory_space<vmem>>)
      %c1_i32_24 = arith.constant 1 : i32
      %c0_i32_25 = arith.constant 0 : i32
      %c0_i32_26 = arith.constant 0 : i32
      %23 = tpu.memref_slice %arg4[%c0_i32_25, %c0_i32_26] : memref<24x128xf32, #tpu.memory_space<any>> -> memref<1x128xf32, #tpu.memory_space<any>>
      %c0_i32_27 = arith.constant 0 : i32
      %24 = tpu.memref_slice %arg9[%18, %c0_i32_27] : memref<8x128xf32, #tpu.memory_space<vmem>> -> memref<1x128xf32, #tpu.memory_space<vmem>>
      %25 = tpu.memref_slice %arg10[%c1_i32_24] : memref<2x!tpu.dma_semaphore, #tpu.memory_space<semaphore_mem>> -> memref<1x!tpu.dma_semaphore, #tpu.memory_space<semaphore_mem>>
      %26 = tpu.memref_squeeze %25 : memref<1x!tpu.dma_semaphore, #tpu.memory_space<semaphore_mem>> -> memref<!tpu.dma_semaphore, #tpu.memory_space<semaphore_mem>>
      tpu.wait_dma2 semaphore(%26 : memref<!tpu.dma_semaphore, #tpu.memory_space<semaphore_mem>>) src(%23 : memref<1x128xf32, #tpu.memory_space<any>>) dst(%24 : memref<1x128xf32, #tpu.memory_space<vmem>>)
    }
    %c8_i32_5 = arith.constant 8 : i32
    %c0 = arith.constant 0 : index
    %c0_6 = arith.constant 0 : index
    %3 = vector.load %arg8[%c0, %c0_6] : memref<8x128xf32, #tpu.memory_space<vmem>>, vector<8x128xf32>
    %c0_7 = arith.constant 0 : index
    %c0_8 = arith.constant 0 : index
    %4 = vector.load %arg9[%c0_7, %c0_8] : memref<8x128xf32, #tpu.memory_space<vmem>>, vector<8x128xf32>
    %5 = arith.addf %3, %4 : vector<8x128xf32>
    %cst = arith.constant 0.000000e+00 : f32
    %6 = vector.broadcast %cst : f32 to vector<8x128xf32>
    %7 = arith.maximumf %5, %6 : vector<8x128xf32>
    %8 = arith.truncf %7 : vector<8x128xf32> to vector<8x128xbf16>
    %c0_9 = arith.constant 0 : index
    %c0_10 = arith.constant 0 : index
    %9 = vector.load %arg5[%c0_9, %c0_10] : memref<128x128xbf16, #tpu.memory_space<vmem>>, vector<128x128xbf16>
    %cst_11 = arith.constant dense<0.000000e+00> : vector<8x128xf32>
    %10 = tpu.matmul %8, %9, %cst_11 {dimension_numbers = #tpu.dot_dimension_numbers<[1], [0], [0], [1], [0, 0, 1, 1], [], []>} : vector<8x128xbf16>, vector<128x128xbf16>, vector<8x128xf32> -> vector<8x128xf32>
    %cst_12 = arith.constant 0.000000e+00 : f32
    %11 = vector.broadcast %cst_12 : f32 to vector<8x128xf32>
    %12 = arith.maximumf %10, %11 : vector<8x128xf32>
    %13 = arith.truncf %12 : vector<8x128xf32> to vector<8x128xbf16>
    %c0_13 = arith.constant 0 : index
    %c0_14 = arith.constant 0 : index
    %14 = vector.load %arg6[%c0_13, %c0_14] : memref<128x8xbf16, #tpu.memory_space<vmem>>, vector<128x8xbf16>
    %cst_15 = arith.constant dense<0.000000e+00> : vector<8x8xf32>
    %15 = tpu.matmul %13, %14, %cst_15 {dimension_numbers = #tpu.dot_dimension_numbers<[1], [0], [0], [1], [0, 0, 1, 1], [], []>} : vector<8x128xbf16>, vector<128x8xbf16>, vector<8x8xf32> -> vector<8x8xf32>
    %c0_16 = arith.constant 0 : index
    %c0_17 = arith.constant 0 : index
    %16 = vector.load %arg7[%c0_16, %c0_17] : memref<8x8xf32, #tpu.memory_space<vmem>>, vector<8x8xf32>
    tpu.vector_store %arg7[%c0_16, %c0_17], %15 {strides = array<i32>} : memref<8x8xf32, #tpu.memory_space<vmem>>, vector<8x8xf32>,
    return
  }
  func.func @transform_2(%arg0: i32, %arg1: memref<8xi32, #tpu.memory_space<smem>>, %arg2: memref<8xi32, #tpu.memory_space<smem>>) -> (i32, i32) {
    %c0_i32 = arith.constant 0 : i32
    %c0_i32_0 = arith.constant 0 : i32
    %c0_i32_1 = arith.constant 0 : i32
    return %c0_i32, %c0_i32_0 : i32, i32
  }
  func.func @transform_3(%arg0: i32, %arg1: memref<8xi32, #tpu.memory_space<smem>>, %arg2: memref<8xi32, #tpu.memory_space<smem>>) -> (i32, i32) {
    %c0_i32 = arith.constant 0 : i32
    %c0_i32_0 = arith.constant 0 : i32
    %c0_i32_1 = arith.constant 0 : i32
    return %c0_i32, %c0_i32_0 : i32, i32
  }
  func.func @transform_4(%arg0: i32, %arg1: memref<8xi32, #tpu.memory_space<smem>>, %arg2: memref<8xi32, #tpu.memory_space<smem>>) -> (i32, i32) {
    %c0_i32 = arith.constant 0 : i32
    %c0_i32_0 = arith.constant 0 : i32
    return %arg0, %c0_i32 : i32, i32
  }
}

</mosaic_0001>

<llo_original>
// kernel: tpu_custom_call.1
$region0: #{tpu_custom_call.1}
  #allocation0 [shape = 'u32[]', space=smem, size = 0x4, offset = 0x4, fixed_abs, tag = 'smem constant byte address 0x4 - core index']
  #allocation1 [shape = 'u32[144,128]{1,0:T(1,128)}', space=vmem, size = 0x12000, scoped, tag = 'internal scratch']
  #allocation2 [shape = 'f32[8,128]{1,0:T(8,128)}', space=vmem, size = 0x1000, scoped, tag = 'scratch operand']
  #allocation3 [shape = 'f32[8,128]{1,0:T(8,128)}', space=vmem, size = 0x1000, scoped, tag = 'scratch operand']
  #allocation4 [shape = 's32[2]{0}', space=sflag, size = 0x8, scoped, tag = 'scratch operand']
  #allocation5 [shape = 's32[1]{0}', space=sflag, size = 0x4, scoped, tag = 'scoped memory for tpu_custom_call.1']
  #allocation6 [shape = 'u8[512]{0}', space=smem, size = 0x200, scoped, tag = 'prefetched SMEM operand 0']
  #allocation7 [shape = 'u8[512]{0}', space=smem, size = 0x200, scoped, tag = 'prefetched SMEM operand 1']
  #allocation10 [shape = 's32[]', space=sflag, size = 0x4, offset = 0, fixed_abs, tag = 'sflag constant byte address 0x0 - dummy sync flag']
  #allocation11 [shape = 's32[]', space=sflag, size = 0x4, offset = 0, fixed_abs, tag = 'sflag constant byte address 0x0 - dummy sync flag']
  #allocation12 [shape = 's32[]', space=sflag, size = 0x4, offset = 0, fixed_abs, tag = 'sflag constant byte address 0x0 - dummy sync flag']
  #allocation13 [shape = 'u32[]', space=smem, size = 0x4, offset = 0x44, fixed_abs, tag = 'smem constant byte address 0x44 - assertion arg 0']
  #allocation14 [shape = 'u32[]', space=smem, size = 0x4, offset = 0x48, fixed_abs, tag = 'smem constant byte address 0x48 - assertion arg 1']
  %s0 = inlined_call_operand.vmem [shape: s32[8], index: 0, kind: input, shape index: {}]
  %s1 = inlined_call_operand.vmem [shape: s32[8], index: 1, kind: input, shape index: {}]
  %s2 = inlined_call_operand.vmem [shape: f32[16,128], index: 2, kind: input, shape index: {}]
  %s3 = inlined_call_operand.hbm [shape: f32[24,128], index: 3, kind: input, shape index: {}]
  %s4 = inlined_call_operand.vmem [shape: bf16[128,128], index: 4, kind: input, shape index: {}]
  %s5 = inlined_call_operand.vmem [shape: bf16[128,8], index: 5, kind: input, shape index: {}]
  %s6 = inlined_call_operand.hbm [shape: f32[8,8], index: 6, kind: output, shape index: {}]
  %s7 = sld [smem:[#allocation0]]
  $region66: #{tpu_custom_call.1} parent=0
    _
  %s9 = ssub.s32 1, %s7
  %s10 = scalar_select 0, %s9, %s7
  %s11 = sshll.u32 %s0, 4
  %s12 = int_to_ptr.vmem [resolvable:$true] %s11
  %14 = dma.vmem_to_smem %s12, 16, [#allocation6], [#allocation5]
  %s15 = sshll.u32 %s1, 4
  %s16 = int_to_ptr.vmem [resolvable:$true] %s15
  %18 = dma.vmem_to_smem %s16, 16, [#allocation7], [#allocation5]
  %19 = dma.done [#allocation5], 32
  %20 = sfence
  $region1: #{tpu_custom_call.1} parent=0
    #allocation8 [shape = 'u8[4096]{0}', space=vmem, size = 0x1000, scoped, tag = 'output window, operand 0, single buffered']
    #allocation9 [shape = 's32[1]{0}', space=sflag, size = 0x4, scoped, tag = 'scoped memory for tpu_custom_call.1']
    %21 = vsyncpa [#allocation9], 0
    // Predicated region
    $region2: #{tpu_custom_call.1} parent=1 // pred_check
      _
    $region3: #{tpu_custom_call.1} parent=1 // pred_check_branch
      %23 = sbr.rel (0) target = $region5
    $region4: #{tpu_custom_call.1} parent=1 // pred_region
      _
    $region5: #{tpu_custom_call.1} parent=1 // pred_fallthru
      _
    // Predicated region
    $region6: #{tpu_custom_call.1} parent=1 // pred_check
      _
    $region7: #{tpu_custom_call.1} parent=1 // pred_check_branch
      %25 = sbr.rel (0) target = $region9
    $region8: #{tpu_custom_call.1} parent=1 // pred_region
      _
    $region9: #{tpu_custom_call.1} parent=1 // pred_fallthru
      _
    %s27 = smul.u32 0, 8
    loop: start=0, step=1, limit=8
    $region10: #{tpu_custom_call.1} parent=1 // loop_pre_header
      _
    $region11: #{tpu_custom_call.1} parent=1 // loop_header
      %s29 = sphi 0, %s33
      %p30 = scmp.ge.s32.totalorder %s29, 8
    $region12: #{tpu_custom_call.1} parent=1 // loop_header_branch
      %32 = sbr.rel (%p30) target = $region16
    $region13: #{tpu_custom_call.1} parent=1 // loop_body
      %s34 = sadd.s32 %s27, %s29
      %s35 = sld [smem:[#allocation6 + %s34]]
      %s36 = sld [smem:[#allocation7 + %s34]]
      %s37 = scalar_lea.vmem %s2, %s35
      %s38 = scalar_lea.vmem [#allocation2], %s29
      %p40 = scmp.lt.u32.totalorder 1, 8
      %p41 = pneg %p40
      // Predicated region
      $region17: #{tpu_custom_call.1} parent=13 // pred_check
        _
      $region18: #{tpu_custom_call.1} parent=13 // pred_check_branch
        %43 = sbr.rel (%p40) target = $region20
      $region19: #{tpu_custom_call.1} parent=13 // pred_region
        %s58 = sand.u32 1, 7
        %p59 = scmp.eq.s32.totalorder %s58, 0
        %p60 = pneg %p59
        // Predicated region
        $region32: #{tpu_custom_call.1} parent=19 // pred_check
          _
        $region33: #{tpu_custom_call.1} parent=19 // pred_check_branch
          %62 = sbr.rel (%p59) target = $region35
        $region34: #{tpu_custom_call.1} parent=19 // pred_region
          %s63 = sand.u32 1, 7
          %s64 = ssub.s32 1, %s63
          %s65 = scalar_lea.vmem %s37, %s64
          %s66 = ssub.s32 1, %s63
          %s67 = scalar_lea.vmem %s38, %s66 [#allocation2]
          %s68 = sshllo.u32 0, %s63
          loop: start=0, step=1, limit=1
          $region36: #{tpu_custom_call.1} parent=34 // loop_pre_header
            _
          $region37: #{tpu_custom_call.1} parent=34 // loop_header
            %s70 = sphi 0, %s74
            %p71 = scmp.ge.s32.totalorder %s70, 1
            %s75 = sphi %s65, %s65
            %s76 = sphi %s67, %s67
          $region38: #{tpu_custom_call.1} parent=34 // loop_header_branch
            %73 = sbr.rel (%p71) target = $region42
          $region39: #{tpu_custom_call.1} parent=34 // loop_body
            %v77 = vld [vmem:[%s75] sm:%s68]
            %78 = vst [vmem:[%s76] sm:%s68] %v77
          $region40: #{tpu_custom_call.1} parent=34 // loop_footer
            %s74 = sadd.s32 1, %s70
          $region41: #{tpu_custom_call.1} parent=34 // loop_footer_branch
            %69 = sbr.rel target = $region37
          $region42: #{tpu_custom_call.1} parent=34 // loop_exit
            _
        $region35: #{tpu_custom_call.1} parent=19 // pred_fallthru
          _
      $region20: #{tpu_custom_call.1} parent=13 // pred_fallthru
        _
      // Predicated region
      $region21: #{tpu_custom_call.1} parent=13 // pred_check
        %p44 = pneg %p40
      $region22: #{tpu_custom_call.1} parent=13 // pred_check_branch
        %46 = sbr.rel (%p44) target = $region24
      $region23: #{tpu_custom_call.1} parent=13 // pred_region
        %s47 = sshllo.u32 0, 1
        loop: start=0, step=1, limit=1
        $region25: #{tpu_custom_call.1} parent=23 // loop_pre_header
          _
        $region26: #{tpu_custom_call.1} parent=23 // loop_header
          %s49 = sphi 0, %s53
          %p50 = scmp.ge.s32.totalorder %s49, 1
          %s54 = sphi %s37, %s37
          %s55 = sphi %s38, %s38
        $region27: #{tpu_custom_call.1} parent=23 // loop_header_branch
          %52 = sbr.rel (%p50) target = $region31
        $region28: #{tpu_custom_call.1} parent=23 // loop_body
          %v56 = vld [vmem:[%s54] sm:%s47]
          %57 = vst [vmem:[%s55] sm:%s47] %v56
        $region29: #{tpu_custom_call.1} parent=23 // loop_footer
          %s53 = sadd.s32 1, %s49
        $region30: #{tpu_custom_call.1} parent=23 // loop_footer_branch
          %48 = sbr.rel target = $region26
        $region31: #{tpu_custom_call.1} parent=23 // loop_exit
          _
      $region24: #{tpu_custom_call.1} parent=13 // pred_fallthru
        _
      // Predicated region
      $region43: #{tpu_custom_call.1} parent=13 // pred_check
        _
      $region44: #{tpu_custom_call.1} parent=13 // pred_check_branch
        %81 = sbr.rel (0) target = $region46
      $region45: #{tpu_custom_call.1} parent=13 // pred_region
        %82 = vsyncadd [#allocation4], 16
      $region46: #{tpu_custom_call.1} parent=13 // pred_fallthru
        _
      %s83 = smul.addr %s36, 16
      %s84 = scalar_lea.hbm %s3, %s83
      %s85 = scalar_lea.vmem [#allocation3], %s29
      %s86 = scalar_lea.sflag [#allocation4], 1
      // Predicated region
      $region47: #{tpu_custom_call.1} parent=13 // pred_check
        _
      $region48: #{tpu_custom_call.1} parent=13 // pred_check_branch
        %88 = sbr.rel target = $region50
      $region49: #{tpu_custom_call.1} parent=13 // pred_region
        %89 = sst [smem:[#allocation13]] [#allocation12]
        %90 = sst [smem:[#allocation14]] [#allocation11]
      $region50: #{tpu_custom_call.1} parent=13 // pred_fallthru
        _
      %92 = shalt.err (0)
      %s94 = sshll.u32 %s85, 4
      %s95 = int_to_ptr.vmem [resolvable:$true] %s94
      %97 = dma.hbm_to_vmem [thread:$0]  %s84, 16, %s95, %s86
    $region14: #{tpu_custom_call.1} parent=1 // loop_footer
      %s33 = sadd.s32 1, %s29
    $region15: #{tpu_custom_call.1} parent=1 // loop_footer_branch
      %28 = sbr.rel target = $region11
    $region16: #{tpu_custom_call.1} parent=1 // loop_exit
      _
    loop: start=0, step=1, limit=8
    $region51: #{tpu_custom_call.1} parent=1 // loop_pre_header
      _
    $region52: #{tpu_custom_call.1} parent=1 // loop_header
      %s99 = sphi 0, %s103
      %p100 = scmp.ge.s32.totalorder %s99, 8
    $region53: #{tpu_custom_call.1} parent=1 // loop_header_branch
      %102 = sbr.rel (%p100) target = $region57
    $region54: #{tpu_custom_call.1} parent=1 // loop_body
      %s104 = smul.u32 1, 1
      %s105 = sshll.u32 %s104, 4
      %106 = dma.done [#allocation4], %s105
      %s107 = scalar_lea.sflag [#allocation4], 1
      %s108 = sshll.u32 %s104, 4
      %109 = dma.done %s107, %s108
    $region55: #{tpu_custom_call.1} parent=1 // loop_footer
      %s103 = sadd.s32 1, %s99
    $region56: #{tpu_custom_call.1} parent=1 // loop_footer_branch
      %98 = sbr.rel target = $region52
    $region57: #{tpu_custom_call.1} parent=1 // loop_exit
      _
    %v110 = vld [vmem:[#allocation2] sm:$0xff]
    %v111 = vld [vmem:[#allocation3] sm:$0xff]
    %v112 = vadd.f32 %v110, %v111
    %v113 = vmax.f32 %v112, 0.0
    %v114 = vpack.c.bf16 %v113, %v113
    %v115 = vld [vmem:[%s4] sm:$0xf]
    %v116 = vld [vmem:[%s4 + $0x4] sm:$0xf]
    %v117 = vld [vmem:[%s4 + $0x8] sm:$0xf]
    %v118 = vld [vmem:[%s4 + $0xc] sm:$0xf]
    %v119 = vld [vmem:[%s4 + $0x10] sm:$0xf]
    %v120 = vld [vmem:[%s4 + $0x14] sm:$0xf]
    %v121 = vld [vmem:[%s4 + $0x18] sm:$0xf]
    %v122 = vld [vmem:[%s4 + $0x1c] sm:$0xf]
    %v123 = vld [vmem:[%s4 + $0x20] sm:$0xf]
    %v124 = vld [vmem:[%s4 + $0x24] sm:$0xf]
    %v125 = vld [vmem:[%s4 + $0x28] sm:$0xf]
    %v126 = vld [vmem:[%s4 + $0x2c] sm:$0xf]
    %v127 = vld [vmem:[%s4 + $0x30] sm:$0xf]
    %v128 = vld [vmem:[%s4 + $0x34] sm:$0xf]
    %v129 = vld [vmem:[%s4 + $0x38] sm:$0xf]
    %v130 = vld [vmem:[%s4 + $0x3c] sm:$0xf]
    %v147 = vunpack.c.l.b16 %v115
    %v148 = vunpack.c.l.b16 %v116
    %v149 = vunpack.c.l.b16 %v117
    %v150 = vunpack.c.l.b16 %v118
    %v151 = vunpack.c.l.b16 %v119
    %v152 = vunpack.c.l.b16 %v120
    %v153 = vunpack.c.l.b16 %v121
    %v154 = vunpack.c.l.b16 %v122
    %v155 = vunpack.c.l.b16 %v123
    %v156 = vunpack.c.l.b16 %v124
    %v157 = vunpack.c.l.b16 %v125
    %v158 = vunpack.c.l.b16 %v126
    %v159 = vunpack.c.l.b16 %v127
    %v160 = vunpack.c.l.b16 %v128
    %v161 = vunpack.c.l.b16 %v129
    %v162 = vunpack.c.l.b16 %v130
    %v163 = vpack.c.b16 %v148, %v147
    %v164 = vpack.c.b16 %v150, %v149
    %v165 = vpack.c.b16 %v152, %v151
    %v166 = vpack.c.b16 %v154, %v153
    %v167 = vpack.c.b16 %v156, %v155
    %v168 = vpack.c.b16 %v158, %v157
    %v169 = vpack.c.b16 %v160, %v159
    %v170 = vpack.c.b16 %v162, %v161
    %179 = vmatprep.subr.bf16.mxu0 0
    %180 = vmatpush1.bf16.msra.mxu0 %v163
    %181 = vmatprep.subr.bf16.mxu0 0
    %182 = vmatpush1.bf16.msra.mxu0 %v164
    %183 = vmatprep.subr.bf16.mxu0 0
    %184 = vmatpush1.bf16.msra.mxu0 %v165
    %185 = vmatprep.subr.bf16.mxu0 0
    %186 = vmatpush1.bf16.msra.mxu0 %v166
    %187 = vmatprep.subr.bf16.mxu0 0
    %188 = vmatpush1.bf16.msra.mxu0 %v167
    %189 = vmatprep.subr.bf16.mxu0 0
    %190 = vmatpush1.bf16.msra.mxu0 %v168
    %191 = vmatprep.subr.bf16.mxu0 0
    %192 = vmatpush1.bf16.msra.mxu0 %v169
    %193 = vmatprep.subr.bf16.mxu0 0
    %194 = vmatpush1.bf16.msra.mxu0 %v170
    %195 = vmatprep.subr.bf16.mxu0 0
    %196 = vmatpush1.bf16.msra.mxu0 0
    %197 = vmatprep.subr.bf16.mxu0 0
    %198 = vmatpush1.bf16.msra.mxu0 0
    %199 = vmatprep.subr.bf16.mxu0 0
    %200 = vmatpush1.bf16.msra.mxu0 0
    %201 = vmatprep.subr.bf16.mxu0 0
    %202 = vmatpush1.bf16.msra.mxu0 0
    %203 = vmatprep.subr.bf16.mxu0 0
    %204 = vmatpush1.bf16.msra.mxu0 0
    %205 = vmatprep.subr.bf16.mxu0 0
    %206 = vmatpush1.bf16.msra.mxu0 0
    %207 = vmatprep.subr.bf16.mxu0 0
    %208 = vmatpush1.bf16.msra.mxu0 0
    %209 = vmatprep.subr.bf16.mxu0 0
    %210 = vmatpush1.bf16.msra.mxu0 0
    %211 = vmatprep.mubr.bf16.mxu0 0
    %212 = vmatmul.mubr.bf16.gmra.mrb[0].mxu0 %v114
    %v213 = vpop.f32.mrb[0].mxu0
    %v214 = vadd.f32 0.0, %v213
    %v215 = vpop.f32.mrb[0].mxu0
    %v216 = vpop.f32.mrb[0].mxu0
    %v217 = vpop.f32.mrb[0].mxu0
    %218 = vdwg.mxu0
    %v219 = vmax.f32 %v214, 0.0
    %v220 = vpack.c.bf16 %v219, %v219
    %v221 = vld [vmem:[%s5] sm:$0xf]
    %v222 = vld [vmem:[%s5 + $0x4] sm:$0xf]
    %v223 = vld [vmem:[%s5 + $0x8] sm:$0xf]
    %v224 = vld [vmem:[%s5 + $0xc] sm:$0xf]
    %v225 = vld [vmem:[%s5 + $0x10] sm:$0xf]
    %v226 = vld [vmem:[%s5 + $0x14] sm:$0xf]
    %v227 = vld [vmem:[%s5 + $0x18] sm:$0xf]
    %v228 = vld [vmem:[%s5 + $0x1c] sm:$0xf]
    %v229 = vld [vmem:[%s5 + $0x20] sm:$0xf]
    %v230 = vld [vmem:[%s5 + $0x24] sm:$0xf]
    %v231 = vld [vmem:[%s5 + $0x28] sm:$0xf]
    %v232 = vld [vmem:[%s5 + $0x2c] sm:$0xf]
    %v233 = vld [vmem:[%s5 + $0x30] sm:$0xf]
    %v234 = vld [vmem:[%s5 + $0x34] sm:$0xf]
    %v235 = vld [vmem:[%s5 + $0x38] sm:$0xf]
    %v236 = vld [vmem:[%s5 + $0x3c] sm:$0xf]
    %v253 = vunpack.c.l.b16 %v221
    %v254 = vunpack.c.l.b16 %v222
    %v255 = vunpack.c.l.b16 %v223
    %v256 = vunpack.c.l.b16 %v224
    %v257 = vunpack.c.l.b16 %v225
    %v258 = vunpack.c.l.b16 %v226
    %v259 = vunpack.c.l.b16 %v227
    %v260 = vunpack.c.l.b16 %v228
    %v261 = vunpack.c.l.b16 %v229
    %v262 = vunpack.c.l.b16 %v230
    %v263 = vunpack.c.l.b16 %v231
    %v264 = vunpack.c.l.b16 %v232
    %v265 = vunpack.c.l.b16 %v233
    %v266 = vunpack.c.l.b16 %v234
    %v267 = vunpack.c.l.b16 %v235
    %v268 = vunpack.c.l.b16 %v236
    %v269 = vpack.c.b16 %v254, %v253
    %v270 = vpack.c.b16 %v256, %v255
    %v271 = vpack.c.b16 %v258, %v257
    %v272 = vpack.c.b16 %v260, %v259
    %v273 = vpack.c.b16 %v262, %v261
    %v274 = vpack.c.b16 %v264, %v263
    %v275 = vpack.c.b16 %v266, %v265
    %v276 = vpack.c.b16 %v268, %v267
    %285 = vmatprep.subr.bf16.mxu0 0
    %286 = vmatpush1.bf16.msra.mxu0 %v269
    %287 = vmatprep.subr.bf16.mxu0 0
    %288 = vmatpush1.bf16.msra.mxu0 %v270
    %289 = vmatprep.subr.bf16.mxu0 0
    %290 = vmatpush1.bf16.msra.mxu0 %v271
    %291 = vmatprep.subr.bf16.mxu0 0
    %292 = vmatpush1.bf16.msra.mxu0 %v272
    %293 = vmatprep.subr.bf16.mxu0 0
    %294 = vmatpush1.bf16.msra.mxu0 %v273
    %295 = vmatprep.subr.bf16.mxu0 0
    %296 = vmatpush1.bf16.msra.mxu0 %v274
    %297 = vmatprep.subr.bf16.mxu0 0
    %298 = vmatpush1.bf16.msra.mxu0 %v275
    %299 = vmatprep.subr.bf16.mxu0 0
    %300 = vmatpush1.bf16.msra.mxu0 %v276
    %301 = vmatprep.subr.bf16.mxu0 0
    %302 = vmatpush1.bf16.msra.mxu0 0
    %303 = vmatprep.subr.bf16.mxu0 0
    %304 = vmatpush1.bf16.msra.mxu0 0
    %305 = vmatprep.subr.bf16.mxu0 0
    %306 = vmatpush1.bf16.msra.mxu0 0
    %307 = vmatprep.subr.bf16.mxu0 0
    %308 = vmatpush1.bf16.msra.mxu0 0
    %309 = vmatprep.subr.bf16.mxu0 0
    %310 = vmatpush1.bf16.msra.mxu0 0
    %311 = vmatprep.subr.bf16.mxu0 0
    %312 = vmatpush1.bf16.msra.mxu0 0
    %313 = vmatprep.subr.bf16.mxu0 0
    %314 = vmatpush1.bf16.msra.mxu0 0
    %315 = vmatprep.subr.bf16.mxu0 0
    %316 = vmatpush1.bf16.msra.mxu0 0
    %317 = vmatprep.mubr.bf16.mxu0 0
    %318 = vmatmul.mubr.bf16.gmra.mrb[0].mxu0 %v220
    %v319 = vpop.f32.mrb[0].mxu0
    %v320 = vadd.f32 0.0, %v319
    %v321 = vpop.f32.mrb[0].mxu0
    %v322 = vpop.f32.mrb[0].mxu0
    %v323 = vpop.f32.mrb[0].mxu0
    %324 = vdwg.mxu0
    %vm325 = vcmask 64512
    %326 = vst.msk [vmem:[#allocation8] sm:$0xff] %vm325, %v320
    // Predicated region
    $region58: #{tpu_custom_call.1} parent=1 // pred_check
      _
    $region59: #{tpu_custom_call.1} parent=1 // pred_check_branch
      %328 = sbr.rel (0) target = $region61
    $region60: #{tpu_custom_call.1} parent=1 // pred_region
      %s330 = ssub.s32 128, 128
      %331 = vsyncadd [#allocation9], %s330
      %s333 = sshll.u32 [#allocation8], 4
      %s334 = int_to_ptr.vmem [resolvable:$true] %s333
      %336 = dma.vmem_to_hbm [thread:$0]  %s334, 128, %s6, [#allocation9]
    $region61: #{tpu_custom_call.1} parent=1 // pred_fallthru
      _
    // Predicated region
    $region62: #{tpu_custom_call.1} parent=1 // pred_check
      _
    $region63: #{tpu_custom_call.1} parent=1 // pred_check_branch
      %338 = sbr.rel (0) target = $region65
    $region64: #{tpu_custom_call.1} parent=1 // pred_region
      %339 = dma.done [#allocation9], 128
    $region65: #{tpu_custom_call.1} parent=1 // pred_fallthru
      _
    %340 = vsyncpa [#allocation9], 1
  %341 = vsyncmov [#allocation4]
  %s342 = vpop.sfrf %341
  %p343 = scmp.eq.s32.totalorder %s342, 0
  %p344 = pneg %p343
  %346 = shalt.err (%p344)
  %s347 = scalar_lea.sflag [#allocation4], 1
  %348 = vsyncmov %s347
  %s349 = vpop.sfrf %348
  %p350 = scmp.eq.s32.totalorder %s349, 0
  %p351 = pneg %p350
  %353 = shalt.err (%p351)

// kernel: tpu_custom_call.1
$region0: #{tpu_custom_call.1}
  #allocation0 [shape = 'u32[]', space=smem, size = 0x4, offset = 0x4, fixed_abs, tag = 'smem constant byte address 0x4 - core index']
  #allocation1 [shape = 'u32[144,128]{1,0:T(1,128)}', space=vmem, size = 0x12000, scoped, tag = 'internal scratch']
  #allocation2 [shape = 'f32[8,128]{1,0:T(8,128)}', space=vmem, size = 0x1000, scoped, tag = 'scratch operand']
  #allocation3 [shape = 'f32[8,128]{1,0:T(8,128)}', space=vmem, size = 0x1000, scoped, tag = 'scratch operand']
  #allocation4 [shape = 's32[2]{0}', space=sflag, size = 0x8, scoped, tag = 'scratch operand']
  #allocation5 [shape = 's32[1]{0}', space=sflag, size = 0x4, scoped, tag = 'scoped memory for tpu_custom_call.1']
  #allocation6 [shape = 'u8[512]{0}', space=smem, size = 0x200, scoped, tag = 'prefetched SMEM operand 0']
  #allocation7 [shape = 'u8[512]{0}', space=smem, size = 0x200, scoped, tag = 'prefetched SMEM operand 1']
  #allocation10 [shape = 's32[]', space=sflag, size = 0x4, offset = 0, fixed_abs, tag = 'sflag constant byte address 0x0 - dummy sync flag']
  #allocation11 [shape = 's32[]', space=sflag, size = 0x4, offset = 0, fixed_abs, tag = 'sflag constant byte address 0x0 - dummy sync flag']
  #allocation12 [shape = 's32[]', space=sflag, size = 0x4, offset = 0, fixed_abs, tag = 'sflag constant byte address 0x0 - dummy sync flag']
  #allocation13 [shape = 'u32[]', space=smem, size = 0x4, offset = 0x44, fixed_abs, tag = 'smem constant byte address 0x44 - assertion arg 0']
  #allocation14 [shape = 'u32[]', space=smem, size = 0x4, offset = 0x48, fixed_abs, tag = 'smem constant byte address 0x48 - assertion arg 1']
  %s0 = inlined_call_operand.vmem [shape: s32[8], index: 0, kind: input, shape index: {}]
  %s1 = inlined_call_operand.vmem [shape: s32[8], index: 1, kind: input, shape index: {}]
  %s2 = inlined_call_operand.vmem [shape: f32[16,128], index: 2, kind: input, shape index: {}]
  %s3 = inlined_call_operand.hbm [shape: f32[24,128], index: 3, kind: input, shape index: {}]
  %s4 = inlined_call_operand.vmem [shape: bf16[128,128], index: 4, kind: input, shape index: {}]
  %s5 = inlined_call_operand.vmem [shape: bf16[128,8], index: 5, kind: input, shape index: {}]
  %s6 = inlined_call_operand.hbm [shape: f32[8,8], index: 6, kind: output, shape index: {}]
  %s7 = sld [smem:[#allocation0]]
  $region66: #{tpu_custom_call.1} parent=0
    _
  %s9 = ssub.s32 1, %s7
  %s10 = scalar_select 0, %s9, %s7
  %s11 = sshll.u32 %s0, 4
  %s12 = int_to_ptr.vmem [resolvable:$true] %s11
  %14 = dma.vmem_to_smem %s12, 16, [#allocation6], [#allocation5]
  %s15 = sshll.u32 %s1, 4
  %s16 = int_to_ptr.vmem [resolvable:$true] %s15
  %18 = dma.vmem_to_smem %s16, 16, [#allocation7], [#allocation5]
  %19 = dma.done [#allocation5], 32
  %20 = sfence
  $region1: #{tpu_custom_call.1} parent=0
    #allocation8 [shape = 'u8[4096]{0}', space=vmem, size = 0x1000, scoped, tag = 'output window, operand 0, single buffered']
    #allocation9 [shape = 's32[1]{0}', space=sflag, size = 0x4, scoped, tag = 'scoped memory for tpu_custom_call.1']
    %21 = vsyncpa [#allocation9], 0
    // Predicated region
    $region2: #{tpu_custom_call.1} parent=1 // pred_check
      _
    $region3: #{tpu_custom_call.1} parent=1 // pred_check_branch
      %23 = sbr.rel (0) target = $region5
    $region4: #{tpu_custom_call.1} parent=1 // pred_region
      _
    $region5: #{tpu_custom_call.1} parent=1 // pred_fallthru
      _
    // Predicated region
    $region6: #{tpu_custom_call.1} parent=1 // pred_check
      _
    $region7: #{tpu_custom_call.1} parent=1 // pred_check_branch
      %25 = sbr.rel (0) target = $region9
    $region8: #{tpu_custom_call.1} parent=1 // pred_region
      _
    $region9: #{tpu_custom_call.1} parent=1 // pred_fallthru
      _
    %s27 = smul.u32 0, 8
    loop: start=0, step=1, limit=8
    $region10: #{tpu_custom_call.1} parent=1 // loop_pre_header
      _
    $region11: #{tpu_custom_call.1} parent=1 // loop_header
      %s29 = sphi 0, %s33
      %p30 = scmp.ge.s32.totalorder %s29, 8
    $region12: #{tpu_custom_call.1} parent=1 // loop_header_branch
      %32 = sbr.rel (%p30) target = $region16
    $region13: #{tpu_custom_call.1} parent=1 // loop_body
      %s34 = sadd.s32 %s27, %s29
      %s35 = sld [smem:[#allocation6 + %s34]]
      %s36 = sld [smem:[#allocation7 + %s34]]
      %s37 = scalar_lea.vmem %s2, %s35
      %s38 = scalar_lea.vmem [#allocation2], %s29
      %p40 = scmp.lt.u32.totalorder 1, 8
      %p41 = pneg %p40
      // Predicated region
      $region17: #{tpu_custom_call.1} parent=13 // pred_check
        _
      $region18: #{tpu_custom_call.1} parent=13 // pred_check_branch
        %43 = sbr.rel (%p40) target = $region20
      $region19: #{tpu_custom_call.1} parent=13 // pred_region
        %s58 = sand.u32 1, 7
        %p59 = scmp.eq.s32.totalorder %s58, 0
        %p60 = pneg %p59
        // Predicated region
        $region32: #{tpu_custom_call.1} parent=19 // pred_check
          _
        $region33: #{tpu_custom_call.1} parent=19 // pred_check_branch
          %62 = sbr.rel (%p59) target = $region35
        $region34: #{tpu_custom_call.1} parent=19 // pred_region
          %s63 = sand.u32 1, 7
          %s64 = ssub.s32 1, %s63
          %s65 = scalar_lea.vmem %s37, %s64
          %s66 = ssub.s32 1, %s63
          %s67 = scalar_lea.vmem %s38, %s66 [#allocation2]
          %s68 = sshllo.u32 0, %s63
          loop: start=0, step=1, limit=1
          $region36: #{tpu_custom_call.1} parent=34 // loop_pre_header
            _
          $region37: #{tpu_custom_call.1} parent=34 // loop_header
            %s70 = sphi 0, %s74
            %p71 = scmp.ge.s32.totalorder %s70, 1
            %s75 = sphi %s65, %s65
            %s76 = sphi %s67, %s67
          $region38: #{tpu_custom_call.1} parent=34 // loop_header_branch
            %73 = sbr.rel (%p71) target = $region42
          $region39: #{tpu_custom_call.1} parent=34 // loop_body
            %v77 = vld [vmem:[%s75] sm:%s68]
            %78 = vst [vmem:[%s76] sm:%s68] %v77
          $region40: #{tpu_custom_call.1} parent=34 // loop_footer
            %s74 = sadd.s32 1, %s70
          $region41: #{tpu_custom_call.1} parent=34 // loop_footer_branch
            %69 = sbr.rel target = $region37
          $region42: #{tpu_custom_call.1} parent=34 // loop_exit
            _
        $region35: #{tpu_custom_call.1} parent=19 // pred_fallthru
          _
      $region20: #{tpu_custom_call.1} parent=13 // pred_fallthru
        _
      // Predicated region
      $region21: #{tpu_custom_call.1} parent=13 // pred_check
        %p44 = pneg %p40
      $region22: #{tpu_custom_call.1} parent=13 // pred_check_branch
        %46 = sbr.rel (%p44) target = $region24
      $region23: #{tpu_custom_call.1} parent=13 // pred_region
        %s47 = sshllo.u32 0, 1
        loop: start=0, step=1, limit=1
        $region25: #{tpu_custom_call.1} parent=23 // loop_pre_header
          _
        $region26: #{tpu_custom_call.1} parent=23 // loop_header
          %s49 = sphi 0, %s53
          %p50 = scmp.ge.s32.totalorder %s49, 1
          %s54 = sphi %s37, %s37
          %s55 = sphi %s38, %s38
        $region27: #{tpu_custom_call.1} parent=23 // loop_header_branch
          %52 = sbr.rel (%p50) target = $region31
        $region28: #{tpu_custom_call.1} parent=23 // loop_body
          %v56 = vld [vmem:[%s54] sm:%s47]
          %57 = vst [vmem:[%s55] sm:%s47] %v56
        $region29: #{tpu_custom_call.1} parent=23 // loop_footer
          %s53 = sadd.s32 1, %s49
        $region30: #{tpu_custom_call.1} parent=23 // loop_footer_branch
          %48 = sbr.rel target = $region26
        $region31: #{tpu_custom_call.1} parent=23 // loop_exit
          _
      $region24: #{tpu_custom_call.1} parent=13 // pred_fallthru
        _
      // Predicated region
      $region43: #{tpu_custom_call.1} parent=13 // pred_check
        _
      $region44: #{tpu_custom_call.1} parent=13 // pred_check_branch
        %81 = sbr.rel (0) target = $region46
      $region45: #{tpu_custom_call.1} parent=13 // pred_region
        %82 = vsyncadd [#allocation4], 16
      $region46: #{tpu_custom_call.1} parent=13 // pred_fallthru
        _
      %s83 = smul.addr %s36, 16
      %s84 = scalar_lea.hbm %s3, %s83
      %s85 = scalar_lea.vmem [#allocation3], %s29
      %s86 = scalar_lea.sflag [#allocation4], 1
      // Predicated region
      $region47: #{tpu_custom_call.1} parent=13 // pred_check
        _
      $region48: #{tpu_custom_call.1} parent=13 // pred_check_branch
        %88 = sbr.rel target = $region50
      $region49: #{tpu_custom_call.1} parent=13 // pred_region
        %89 = sst [smem:[#allocation13]] [#allocation12]
        %90 = sst [smem:[#allocation14]] [#allocation11]
      $region50: #{tpu_custom_call.1} parent=13 // pred_fallthru
        _
      %92 = shalt.err (0)
      %s94 = sshll.u32 %s85, 4
      %s95 = int_to_ptr.vmem [resolvable:$true] %s94
      %97 = dma.hbm_to_vmem [thread:$0]  %s84, 16, %s95, %s86
    $region14: #{tpu_custom_call.1} parent=1 // loop_footer
      %s33 = sadd.s32 1, %s29
    $region15: #{tpu_custom_call.1} parent=1 // loop_footer_branch
      %28 = sbr.rel target = $region11
    $region16: #{tpu_custom_call.1} parent=1 // loop_exit
      _
    loop: start=0, step=1, limit=8
    $region51: #{tpu_custom_call.1} parent=1 // loop_pre_header
      _
    $region52: #{tpu_custom_call.1} parent=1 // loop_header
      %s99 = sphi 0, %s103
      %p100 = scmp.ge.s32.totalorder %s99, 8
    $region53: #{tpu_custom_call.1} parent=1 // loop_header_branch
      %102 = sbr.rel (%p100) target = $region57
    $region54: #{tpu_custom_call.1} parent=1 // loop_body
      %s104 = smul.u32 1, 1
      %s105 = sshll.u32 %s104, 4
      %106 = dma.done [#allocation4], %s105
      %s107 = scalar_lea.sflag [#allocation4], 1
      %s108 = sshll.u32 %s104, 4
      %109 = dma.done %s107, %s108
    $region55: #{tpu_custom_call.1} parent=1 // loop_footer
      %s103 = sadd.s32 1, %s99
    $region56: #{tpu_custom_call.1} parent=1 // loop_footer_branch
      %98 = sbr.rel target = $region52
    $region57: #{tpu_custom_call.1} parent=1 // loop_exit
      _
    %v110 = vld [vmem:[#allocation2] sm:$0xff]
    %v111 = vld [vmem:[#allocation3] sm:$0xff]
    %v112 = vadd.f32 %v110, %v111
    %v113 = vmax.f32 %v112, 0.0
    %v114 = vpack.c.bf16 %v113, %v113
    %v115 = vld [vmem:[%s4] sm:$0xf]
    %v116 = vld [vmem:[%s4 + $0x4] sm:$0xf]
    %v117 = vld [vmem:[%s4 + $0x8] sm:$0xf]
    %v118 = vld [vmem:[%s4 + $0xc] sm:$0xf]
    %v119 = vld [vmem:[%s4 + $0x10] sm:$0xf]
    %v120 = vld [vmem:[%s4 + $0x14] sm:$0xf]
    %v121 = vld [vmem:[%s4 + $0x18] sm:$0xf]
    %v122 = vld [vmem:[%s4 + $0x1c] sm:$0xf]
    %v123 = vld [vmem:[%s4 + $0x20] sm:$0xf]
    %v124 = vld [vmem:[%s4 + $0x24] sm:$0xf]
    %v125 = vld [vmem:[%s4 + $0x28] sm:$0xf]
    %v126 = vld [vmem:[%s4 + $0x2c] sm:$0xf]
    %v127 = vld [vmem:[%s4 + $0x30] sm:$0xf]
    %v128 = vld [vmem:[%s4 + $0x34] sm:$0xf]
    %v129 = vld [vmem:[%s4 + $0x38] sm:$0xf]
    %v130 = vld [vmem:[%s4 + $0x3c] sm:$0xf]
    %v147 = vunpack.c.l.b16 %v115
    %v148 = vunpack.c.l.b16 %v116
    %v149 = vunpack.c.l.b16 %v117
    %v150 = vunpack.c.l.b16 %v118
    %v151 = vunpack.c.l.b16 %v119
    %v152 = vunpack.c.l.b16 %v120
    %v153 = vunpack.c.l.b16 %v121
    %v154 = vunpack.c.l.b16 %v122
    %v155 = vunpack.c.l.b16 %v123
    %v156 = vunpack.c.l.b16 %v124
    %v157 = vunpack.c.l.b16 %v125
    %v158 = vunpack.c.l.b16 %v126
    %v159 = vunpack.c.l.b16 %v127
    %v160 = vunpack.c.l.b16 %v128
    %v161 = vunpack.c.l.b16 %v129
    %v162 = vunpack.c.l.b16 %v130
    %v163 = vpack.c.b16 %v148, %v147
    %v164 = vpack.c.b16 %v150, %v149
    %v165 = vpack.c.b16 %v152, %v151
    %v166 = vpack.c.b16 %v154, %v153
    %v167 = vpack.c.b16 %v156, %v155
    %v168 = vpack.c.b16 %v158, %v157
    %v169 = vpack.c.b16 %v160, %v159
    %v170 = vpack.c.b16 %v162, %v161
    %179 = vmatprep.subr.bf16.mxu0 0
    %180 = vmatpush1.bf16.msra.mxu0 %v163
    %181 = vmatprep.subr.bf16.mxu0 0
    %182 = vmatpush1.bf16.msra.mxu0 %v164
    %183 = vmatprep.subr.bf16.mxu0 0
    %184 = vmatpush1.bf16.msra.mxu0 %v165
    %185 = vmatprep.subr.bf16.mxu0 0
    %186 = vmatpush1.bf16.msra.mxu0 %v166
    %187 = vmatprep.subr.bf16.mxu0 0
    %188 = vmatpush1.bf16.msra.mxu0 %v167
    %189 = vmatprep.subr.bf16.mxu0 0
    %190 = vmatpush1.bf16.msra.mxu0 %v168
    %191 = vmatprep.subr.bf16.mxu0 0
    %192 = vmatpush1.bf16.msra.mxu0 %v169
    %193 = vmatprep.subr.bf16.mxu0 0
    %194 = vmatpush1.bf16.msra.mxu0 %v170
    %195 = vmatprep.subr.bf16.mxu0 0
    %196 = vmatpush1.bf16.msra.mxu0 0
    %197 = vmatprep.subr.bf16.mxu0 0
    %198 = vmatpush1.bf16.msra.mxu0 0
    %199 = vmatprep.subr.bf16.mxu0 0
    %200 = vmatpush1.bf16.msra.mxu0 0
    %201 = vmatprep.subr.bf16.mxu0 0
    %202 = vmatpush1.bf16.msra.mxu0 0
    %203 = vmatprep.subr.bf16.mxu0 0
    %204 = vmatpush1.bf16.msra.mxu0 0
    %205 = vmatprep.subr.bf16.mxu0 0
    %206 = vmatpush1.bf16.msra.mxu0 0
    %207 = vmatprep.subr.bf16.mxu0 0
    %208 = vmatpush1.bf16.msra.mxu0 0
    %209 = vmatprep.subr.bf16.mxu0 0
    %210 = vmatpush1.bf16.msra.mxu0 0
    %211 = vmatprep.mubr.bf16.mxu0 0
    %212 = vmatmul.mubr.bf16.gmra.mrb[0].mxu0 %v114
    %v213 = vpop.f32.mrb[0].mxu0
    %v214 = vadd.f32 0.0, %v213
    %v215 = vpop.f32.mrb[0].mxu0
    %v216 = vpop.f32.mrb[0].mxu0
    %v217 = vpop.f32.mrb[0].mxu0
    %218 = vdwg.mxu0
    %v219 = vmax.f32 %v214, 0.0
    %v220 = vpack.c.bf16 %v219, %v219
    %v221 = vld [vmem:[%s5] sm:$0xf]
    %v222 = vld [vmem:[%s5 + $0x4] sm:$0xf]
    %v223 = vld [vmem:[%s5 + $0x8] sm:$0xf]
    %v224 = vld [vmem:[%s5 + $0xc] sm:$0xf]
    %v225 = vld [vmem:[%s5 + $0x10] sm:$0xf]
    %v226 = vld [vmem:[%s5 + $0x14] sm:$0xf]
    %v227 = vld [vmem:[%s5 + $0x18] sm:$0xf]
    %v228 = vld [vmem:[%s5 + $0x1c] sm:$0xf]
    %v229 = vld [vmem:[%s5 + $0x20] sm:$0xf]
    %v230 = vld [vmem:[%s5 + $0x24] sm:$0xf]
    %v231 = vld [vmem:[%s5 + $0x28] sm:$0xf]
    %v232 = vld [vmem:[%s5 + $0x2c] sm:$0xf]
    %v233 = vld [vmem:[%s5 + $0x30] sm:$0xf]
    %v234 = vld [vmem:[%s5 + $0x34] sm:$0xf]
    %v235 = vld [vmem:[%s5 + $0x38] sm:$0xf]
    %v236 = vld [vmem:[%s5 + $0x3c] sm:$0xf]
    %v253 = vunpack.c.l.b16 %v221
    %v254 = vunpack.c.l.b16 %v222
    %v255 = vunpack.c.l.b16 %v223
    %v256 = vunpack.c.l.b16 %v224
    %v257 = vunpack.c.l.b16 %v225
    %v258 = vunpack.c.l.b16 %v226
    %v259 = vunpack.c.l.b16 %v227
    %v260 = vunpack.c.l.b16 %v228
    %v261 = vunpack.c.l.b16 %v229
    %v262 = vunpack.c.l.b16 %v230
    %v263 = vunpack.c.l.b16 %v231
    %v264 = vunpack.c.l.b16 %v232
    %v265 = vunpack.c.l.b16 %v233
    %v266 = vunpack.c.l.b16 %v234
    %v267 = vunpack.c.l.b16 %v235
    %v268 = vunpack.c.l.b16 %v236
    %v269 = vpack.c.b16 %v254, %v253
    %v270 = vpack.c.b16 %v256, %v255
    %v271 = vpack.c.b16 %v258, %v257
    %v272 = vpack.c.b16 %v260, %v259
    %v273 = vpack.c.b16 %v262, %v261
    %v274 = vpack.c.b16 %v264, %v263
    %v275 = vpack.c.b16 %v266, %v265
    %v276 = vpack.c.b16 %v268, %v267
    %285 = vmatprep.subr.bf16.mxu0 0
    %286 = vmatpush1.bf16.msra.mxu0 %v269
    %287 = vmatprep.subr.bf16.mxu0 0
    %288 = vmatpush1.bf16.msra.mxu0 %v270
    %289 = vmatprep.subr.bf16.mxu0 0
    %290 = vmatpush1.bf16.msra.mxu0 %v271
    %291 = vmatprep.subr.bf16.mxu0 0
    %292 = vmatpush1.bf16.msra.mxu0 %v272
    %293 = vmatprep.subr.bf16.mxu0 0
    %294 = vmatpush1.bf16.msra.mxu0 %v273
    %295 = vmatprep.subr.bf16.mxu0 0
    %296 = vmatpush1.bf16.msra.mxu0 %v274
    %297 = vmatprep.subr.bf16.mxu0 0
    %298 = vmatpush1.bf16.msra.mxu0 %v275
    %299 = vmatprep.subr.bf16.mxu0 0
    %300 = vmatpush1.bf16.msra.mxu0 %v276
    %301 = vmatprep.subr.bf16.mxu0 0
    %302 = vmatpush1.bf16.msra.mxu0 0
    %303 = vmatprep.subr.bf16.mxu0 0
    %304 = vmatpush1.bf16.msra.mxu0 0
    %305 = vmatprep.subr.bf16.mxu0 0
    %306 = vmatpush1.bf16.msra.mxu0 0
    %307 = vmatprep.subr.bf16.mxu0 0
    %308 = vmatpush1.bf16.msra.mxu0 0
    %309 = vmatprep.subr.bf16.mxu0 0
    %310 = vmatpush1.bf16.msra.mxu0 0
    %311 = vmatprep.subr.bf16.mxu0 0
    %312 = vmatpush1.bf16.msra.mxu0 0
    %313 = vmatprep.subr.bf16.mxu0 0
    %314 = vmatpush1.bf16.msra.mxu0 0
    %315 = vmatprep.subr.bf16.mxu0 0
    %316 = vmatpush1.bf16.msra.mxu0 0
    %317 = vmatprep.mubr.bf16.mxu0 0
    %318 = vmatmul.mubr.bf16.gmra.mrb[0].mxu0 %v220
    %v319 = vpop.f32.mrb[0].mxu0
    %v320 = vadd.f32 0.0, %v319
    %v321 = vpop.f32.mrb[0].mxu0
    %v322 = vpop.f32.mrb[0].mxu0
    %v323 = vpop.f32.mrb[0].mxu0
    %324 = vdwg.mxu0
    %vm325 = vcmask 64512
    %326 = vst.msk [vmem:[#allocation8] sm:$0xff] %vm325, %v320
    // Predicated region
    $region58: #{tpu_custom_call.1} parent=1 // pred_check
      _
    $region59: #{tpu_custom_call.1} parent=1 // pred_check_branch
      %328 = sbr.rel (0) target = $region61
    $region60: #{tpu_custom_call.1} parent=1 // pred_region
      %s330 = ssub.s32 128, 128
      %331 = vsyncadd [#allocation9], %s330
      %s333 = sshll.u32 [#allocation8], 4
      %s334 = int_to_ptr.vmem [resolvable:$true] %s333
      %336 = dma.vmem_to_hbm [thread:$0]  %s334, 128, %s6, [#allocation9]
    $region61: #{tpu_custom_call.1} parent=1 // pred_fallthru
      _
    // Predicated region
    $region62: #{tpu_custom_call.1} parent=1 // pred_check
      _
    $region63: #{tpu_custom_call.1} parent=1 // pred_check_branch
      %338 = sbr.rel (0) target = $region65
    $region64: #{tpu_custom_call.1} parent=1 // pred_region
      %339 = dma.done [#allocation9], 128
    $region65: #{tpu_custom_call.1} parent=1 // pred_fallthru
      _
    %340 = vsyncpa [#allocation9], 1
  %341 = vsyncmov [#allocation4]
  %s342 = vpop.sfrf %341
  %p343 = scmp.eq.s32.totalorder %s342, 0
  %p344 = pneg %p343
  %346 = shalt.err (%p344)
  %s347 = scalar_lea.sflag [#allocation4], 1
  %348 = vsyncmov %s347
  %s349 = vpop.sfrf %348
  %p350 = scmp.eq.s32.totalorder %s349, 0
  %p351 = pneg %p350
  %353 = shalt.err (%p351)

</llo_original>
